<compile_context>
chip_gen: v7x
topology: tpu7x:2x2x1
jax: 0.10.0
libtpu: 0.0.40
codegen_flags: <defaults>
</compile_context>

<pallas_src>
import math

import jax
import jax.numpy as jnp
from jax import lax
from jax.experimental import pallas as pl
from jax.experimental.pallas import tpu as pltpu


def distmult_kernel(x1_ref, x2_ref, w_ref, bias_ref, o_ref):
    # x1_ref: (TM, D) bf16 VMEM, x2_ref: (TN, D) bf16 VMEM,
    # w_ref:  (1, D) f32 VMEM (pre-selected relation row, resident),
    # bias_ref: SMEM f32[1], o_ref: (TM, TN) VMEM.
    w_row = w_ref[0, :]                                             # (D,) f32
    # input1 @ diag(w) == row-wise elementwise scale. bf16 * f32 promotes to f32
    # (keeps the scale accurate), then cast back to bf16 for MXU rate.
    scaled = (x1_ref[...] * w_row[None, :]).astype(jnp.bfloat16)    # (TM, D)
    # Contract D on both operands: (TM, D) x (TN, D) -> (TM, TN), f32 accumulate.
    out = lax.dot_general(
        scaled, x2_ref[...],
        dimension_numbers=(((1,), (1,)), ((), ())),
        preferred_element_type=jnp.float32)
    o_ref[...] = (out + bias_ref[0]).astype(o_ref.dtype)


def distmult_decoder(input1, input2, type_index, weight, bias, *,
                     tm=512, tn=1024, out_dtype=jnp.float32):
    """Pallas-backed DistMultDecoder.forward (act = identity).

    input1: (N1, D) f32, input2: (N2, D) f32, type_index: (1,) int32,
    weight: (num_types, D) f32, bias: (1,) f32. Returns (N1, N2) out_dtype.
    """
    N1, D = input1.shape
    N2, D2 = input2.shape
    assert D == D2
    assert weight.shape[1] == D

    # Select the relation row in the wrapper (tiny gather) so the kernel's weight
    # block (1, D) equals the full array — no sub-(8,128) sublane block.
    w_row = weight[type_index[0]][None, :].astype(jnp.float32)      # (1, D)

    # bf16 operands: MXU consumes bf16 anyway; halves all input HBM traffic.
    x1 = input1.astype(jnp.bfloat16)
    x2 = input2.astype(jnp.bfloat16)

    # Clamp tiles to the problem size (full-extent blocks are exempt from the
    # (8,128) divisibility rule); otherwise keep lane/sublane-aligned tiles and
    # let Pallas mask the ragged edge blocks.
    tm = N1 if tm >= N1 else tm
    tn = N2 if tn >= N2 else tn
    assert tm == N1 or tm % 8 == 0, "tm must be a multiple of 8 (or >= N1)"
    assert tn == N2 or tn % 128 == 0, "tn must be a multiple of 128 (or >= N2)"

    gi = pl.cdiv(N1, tm)
    gj = pl.cdiv(N2, tn)

    # Put the axis whose inner-sweep re-fetch traffic is smaller on the OUTER
    # grid axis: the outer operand's block index is constant across the inner
    # sweep, so it is DMA'd from HBM exactly once.
    refetch_if_i_outer = gi * N2      # x2 re-fetched gi times
    refetch_if_j_outer = gj * N1      # x1 re-fetched gj times
    if refetch_if_i_outer <= refetch_if_j_outer:
        grid = (gi, gj)
        x1_map = lambda i, j: (i, 0)
        x2_map = lambda i, j: (j, 0)
        out_map = lambda i, j: (i, j)
    else:
        grid = (gj, gi)
        x1_map = lambda j, i: (i, 0)
        x2_map = lambda j, i: (j, 0)
        out_map = lambda j, i: (i, j)

    w_map = lambda *_: (0, 0)         # constant -> DMA'd once, resident

    return pl.pallas_call(
        distmult_kernel,
        out_shape=jax.ShapeDtypeStruct((N1, N2), out_dtype),
        grid=grid,
        in_specs=[
            pl.BlockSpec((tm, D), x1_map),              # x1 tile (bf16)
            pl.BlockSpec((tn, D), x2_map),              # x2 tile (bf16)
            pl.BlockSpec((1, D), w_map),                # selected relation row
            pl.BlockSpec(memory_space=pltpu.SMEM),      # scalar bias
        ],
        out_specs=pl.BlockSpec((tm, tn), out_map),
        compiler_params=pltpu.CompilerParams(
            dimension_semantics=("parallel", "parallel")),
    )(x1, x2, w_row, bias)


if __name__ == "__main__":
    # Small, deterministic problem consistent with the module's forward.
    # Non-multiple sizes exercise the ragged-edge (masked block) path; D = 128.
    N1, N2 = 200, 304       # head / tail entity counts
    D = 128                 # input_dim (hidden size)
    num_types = 8           # number of relation types

    key = jax.random.PRNGKey(0)
    k1, k2, kw, kb = jax.random.split(key, 4)

    input1 = jax.random.normal(k1, (N1, D), dtype=jnp.float32)
    input2 = jax.random.normal(k2, (N2, D), dtype=jnp.float32)

    # reset_parameters(): uniform(-stdv, stdv), stdv = sqrt(6 / input_dim)
    stdv = math.sqrt(6.0 / D)
    weight = jax.random.uniform(kw, (num_types, D), dtype=jnp.float32,
                                minval=-stdv, maxval=stdv)
    # bias = Parameter(torch.rand(1)): uniform [0, 1)
    bias = jax.random.uniform(kb, (1,), dtype=jnp.float32)

    type_index = jnp.array([3], dtype=jnp.int32)

    # Default (large) tiles -> tiles clamp to full dims, 1x1 grid on this demo.
    out = distmult_decoder(input1, input2, type_index, weight, bias)
    out = jax.block_until_ready(out)
    assert out.shape == (N1, N2)

    # Small tiles -> multi-tile grid with ragged edge blocks (exercises masking).
    out_tiled = distmult_decoder(input1, input2, type_index, weight, bias,
                                 tm=64, tn=128)
    out_tiled = jax.block_until_ready(out_tiled)
    assert out_tiled.shape == (N1, N2)

    # Pure-JAX references. The kernel feeds bf16 operands to the MXU with f32
    # accumulation, so compare against a bf16-input reference (tight) and the
    # full-f32 reference (loose).
    w_row = weight[type_index[0]]
    x1_bf = input1.astype(jnp.bfloat16).astype(jnp.float32)
    x2_bf = input2.astype(jnp.bfloat16).astype(jnp.float32)
    scaled_ref = (x1_bf * w_row[None, :]).astype(jnp.bfloat16).astype(jnp.float32)
    ref_bf16 = scaled_ref @ x2_bf.T + bias[0]
    ref_f32 = (input1 * w_row[None, :]) @ input2.T + bias[0]

    assert jnp.allclose(out, ref_bf16, atol=2e-2, rtol=2e-2), "mismatch vs bf16 ref"
    assert jnp.allclose(out_tiled, ref_bf16, atol=2e-2, rtol=2e-2), "tiled mismatch"
    assert jnp.allclose(out, ref_f32, atol=1.5e-1, rtol=5e-2), "mismatch vs f32 ref"
    assert jnp.allclose(out, out_tiled, atol=1e-5, rtol=1e-5), "tile-size dependence"

    print("KERNEL_OK")
</pallas_src>

<mosaic_0001>
module attributes {stable_mosaic.version = 11 : i64} {
  func.func @distmult_kernel(%arg0: i32, %arg1: i32, %arg2: memref<200x128xbf16, #tpu.memory_space<vmem>>, %arg3: memref<304x128xbf16, #tpu.memory_space<vmem>>, %arg4: memref<1x128xf32, #tpu.memory_space<vmem>>, %arg5: memref<1xf32, #tpu.memory_space<smem>>, %arg6: memref<200x304xf32, #tpu.memory_space<vmem>>) attributes {dimension_semantics = [#tpu.dimension_semantics<parallel>, #tpu.dimension_semantics<parallel>], iteration_bounds = array<i64: 1, 1>, scalar_prefetch = 0 : i64, scratch_operands = 0 : i64, tpu.core_type = #tpu.core_type<tc>, window_params = [{transform_indices = @transform_0, window_bounds = array<i64: 200, 128>}, {transform_indices = @transform_1, window_bounds = array<i64: 304, 128>}, {pipeline_mode = #tpu.pipeline_mode<synchronous>, transform_indices = @transform_2, window_bounds = array<i64: 1, 128>}, {transform_indices = @transform_3, window_bounds = array<i64: 1>}, {transform_indices = @transform_4, window_bounds = array<i64: 200, 304>}]} {
    %c0 = arith.constant 0 : index
    %c0_0 = arith.constant 0 : index
    %0 = vector.load %arg4[%c0, %c0_0] : memref<1x128xf32, #tpu.memory_space<vmem>>, vector<1x128xf32>
    %1 = vector.shape_cast %0 : vector<1x128xf32> to vector<128xf32>
    %c0_1 = arith.constant 0 : index
    %c0_2 = arith.constant 0 : index
    %2 = vector.load %arg2[%c0_1, %c0_2] : memref<200x128xbf16, #tpu.memory_space<vmem>>, vector<200x128xbf16>
    %3 = vector.shape_cast %1 : vector<128xf32> to vector<1x128xf32>
    %4 = arith.extf %2 : vector<200x128xbf16> to vector<200x128xf32>
    %5 = vector.broadcast %3 : vector<1x128xf32> to vector<200x128xf32>
    %6 = arith.mulf %4, %5 : vector<200x128xf32>
    %7 = arith.truncf %6 : vector<200x128xf32> to vector<200x128xbf16>
    %c0_3 = arith.constant 0 : index
    %c0_4 = arith.constant 0 : index
    %8 = vector.load %arg3[%c0_3, %c0_4] : memref<304x128xbf16, #tpu.memory_space<vmem>>, vector<304x128xbf16>
    %cst = arith.constant dense<0.000000e+00> : vector<200x304xf32>
    %9 = tpu.matmul %7, %8, %cst {dimension_numbers = #tpu.dot_dimension_numbers<[1], [1], [0], [0], [0, 0, 1, 0], [], []>} : vector<200x128xbf16>, vector<304x128xbf16>, vector<200x304xf32> -> vector<200x304xf32>
    %c0_5 = arith.constant 0 : index
    %10 = memref.load %arg5[%c0_5] : memref<1xf32, #tpu.memory_space<smem>>
    %11 = vector.broadcast %10 : f32 to vector<200x304xf32>
    %12 = arith.addf %9, %11 : vector<200x304xf32>
    %c0_6 = arith.constant 0 : index
    %c0_7 = arith.constant 0 : index
    %13 = vector.load %arg6[%c0_6, %c0_7] : memref<200x304xf32, #tpu.memory_space<vmem>>, vector<200x304xf32>
    tpu.vector_store %arg6[%c0_6, %c0_7], %12 {strides = array<i32>} : memref<200x304xf32, #tpu.memory_space<vmem>>, vector<200x304xf32>,
    return
  }
  func.func @transform_0(%arg0: i32, %arg1: i32) -> (i32, i32) {
    %c0_i32 = arith.constant 0 : i32
    %c0_i32_0 = arith.constant 0 : i32
    return %arg1, %c0_i32 : i32, i32
  }
  func.func @transform_1(%arg0: i32, %arg1: i32) -> (i32, i32) {
    %c0_i32 = arith.constant 0 : i32
    %c0_i32_0 = arith.constant 0 : i32
    return %arg0, %c0_i32 : i32, i32
  }
  func.func @transform_2(%arg0: i32, %arg1: i32) -> (i32, i32) {
    %c0_i32 = arith.constant 0 : i32
    %c0_i32_0 = arith.constant 0 : i32
    %c0_i32_1 = arith.constant 0 : i32
    return %c0_i32, %c0_i32_0 : i32, i32
  }
  func.func @transform_3(%arg0: i32, %arg1: i32) -> i32 {
    %c0_i32 = arith.constant 0 : i32
    %c0_i32_0 = arith.constant 0 : i32
    return %c0_i32 : i32
  }
  func.func @transform_4(%arg0: i32, %arg1: i32) -> (i32, i32) {
    %c0_i32 = arith.constant 0 : i32
    return %arg1, %arg0 : i32, i32
  }
}

</mosaic_0001>

<llo_original>
// kernel: tpu_custom_call.1
$region0: #{tpu_custom_call.1}
  #allocation0 [shape = 'u32[]', space=smem, size = 0x4, offset = 0x4, fixed_abs, tag = 'smem constant byte address 0x4 - core index']
  #allocation1 [shape = 'u32[144,128]{1,0:T(1,128)}', space=vmem, size = 0x12000, scoped, tag = 'internal scratch']
  #allocation2 [shape = 'f32[1]{0:T(128)S(6)}', space=smem, size = 0x200, scoped, tag = 'scoped memory for tpu_custom_call.1']
  %s0 = inlined_call_operand.hbm [shape: bf16[200,128], index: 0, kind: input, shape index: {}]
  %s1 = inlined_call_operand.hbm [shape: bf16[304,128], index: 1, kind: input, shape index: {}]
  %s2 = inlined_call_operand.vmem [shape: f32[1,128], index: 2, kind: input, shape index: {}]
  %s3 = inlined_call_operand.<no memory space> [shape: f32[1], index: 3, kind: input, shape index: {}]
  %s4 = inlined_call_operand.hbm [shape: f32[200,304], index: 4, kind: output, shape index: {}]
  %s5 = sld [smem:[#allocation0]]
  $region34: #{tpu_custom_call.1} parent=0
    _
  %s7 = ssub.s32 1, %s5
  %s8 = scalar_select 0, %s7, %s5
  %9 = sst [smem:[#allocation2]] %s3
  $region1: #{tpu_custom_call.1} parent=0
    #allocation3 [shape = 'u8[51200]{0}', space=vmem, size = 0xc800, scoped, tag = 'input window, operand 0, single buffered']
    #allocation4 [shape = 's32[1]{0}', space=sflag, size = 0x4, scoped, tag = 'scoped memory for tpu_custom_call.1']
    #allocation5 [shape = 's32[1]{0}', space=sflag, size = 0x4, scoped, tag = 'scoped memory for tpu_custom_call.1']
    #allocation6 [shape = 'u8[77824]{0}', space=vmem, size = 0x13000, scoped, tag = 'input window, operand 1, single buffered']
    #allocation7 [shape = 's32[1]{0}', space=sflag, size = 0x4, scoped, tag = 'scoped memory for tpu_custom_call.1']
    #allocation8 [shape = 'u8[307200]{0}', space=vmem, size = 0x4b000, scoped, tag = 'output window, operand 0, single buffered']
    %10 = vsyncpa [#allocation4], 0
    %11 = vsyncpa [#allocation7], 0
    %12 = vsyncpa [#allocation5], 0
    // Predicated region
    $region2: #{tpu_custom_call.1} parent=1 // pred_check
      _
    $region3: #{tpu_custom_call.1} parent=1 // pred_check_branch
      %14 = sbr.rel (0) target = $region5
    $region4: #{tpu_custom_call.1} parent=1 // pred_region
      %s16 = ssub.s32 1600, 1600
      %17 = vsyncadd [#allocation4], %s16
      %s18 = sshll.u32 [#allocation3], 4
      %s19 = int_to_ptr.vmem [resolvable:$true] %s18
      %24 = dma.hbm_to_vmem [thread:$0]  %s0, 1600, %s19, [#allocation4], 64, 64, 4
    $region5: #{tpu_custom_call.1} parent=1 // pred_fallthru
      _
    // Predicated region
    $region6: #{tpu_custom_call.1} parent=1 // pred_check
      _
    $region7: #{tpu_custom_call.1} parent=1 // pred_check_branch
      %26 = sbr.rel (0) target = $region9
    $region8: #{tpu_custom_call.1} parent=1 // pred_region
      %s28 = ssub.s32 2432, 2432
      %29 = vsyncadd [#allocation7], %s28
      %s30 = sshll.u32 [#allocation6], 4
      %s31 = int_to_ptr.vmem [resolvable:$true] %s30
      %36 = dma.hbm_to_vmem [thread:$0]  %s1, 2432, %s31, [#allocation7], 64, 64, 4
    $region9: #{tpu_custom_call.1} parent=1 // pred_fallthru
      _
    // Predicated region
    $region10: #{tpu_custom_call.1} parent=1 // pred_check
      _
    $region11: #{tpu_custom_call.1} parent=1 // pred_check_branch
      %38 = sbr.rel (0) target = $region13
    $region12: #{tpu_custom_call.1} parent=1 // pred_region
      _
    $region13: #{tpu_custom_call.1} parent=1 // pred_fallthru
      _
    // Predicated region
    $region14: #{tpu_custom_call.1} parent=1 // pred_check
      _
    $region15: #{tpu_custom_call.1} parent=1 // pred_check_branch
      %40 = sbr.rel (0) target = $region17
    $region16: #{tpu_custom_call.1} parent=1 // pred_region
      _
    $region17: #{tpu_custom_call.1} parent=1 // pred_fallthru
      _
    // Predicated region
    $region18: #{tpu_custom_call.1} parent=1 // pred_check
      _
    $region19: #{tpu_custom_call.1} parent=1 // pred_check_branch
      %42 = sbr.rel (0) target = $region21
    $region20: #{tpu_custom_call.1} parent=1 // pred_region
      %43 = dma.done [#allocation4], 1600
    $region21: #{tpu_custom_call.1} parent=1 // pred_fallthru
      _
    // Predicated region
    $region22: #{tpu_custom_call.1} parent=1 // pred_check
      _
    $region23: #{tpu_custom_call.1} parent=1 // pred_check_branch
      %45 = sbr.rel (0) target = $region25
    $region24: #{tpu_custom_call.1} parent=1 // pred_region
      %46 = dma.done [#allocation7], 2432
    $region25: #{tpu_custom_call.1} parent=1 // pred_fallthru
      _
    %v48 = vld [vmem:[%s2] sm:$0x1]
    %v49 = vld [vmem:[#allocation3] sm:$0xf]
    %v50 = vld [vmem:[#allocation3 + $0x4] sm:$0xf]
    %v51 = vld [vmem:[#allocation3 + $0x8] sm:$0xf]
    %v52 = vld [vmem:[#allocation3 + $0xc] sm:$0xf]
    %v53 = vld [vmem:[#allocation3 + $0x10] sm:$0xf]
    %v54 = vld [vmem:[#allocation3 + $0x14] sm:$0xf]
    %v55 = vld [vmem:[#allocation3 + $0x18] sm:$0xf]
    %v56 = vld [vmem:[#allocation3 + $0x1c] sm:$0xf]
    %v57 = vld [vmem:[#allocation3 + $0x20] sm:$0xf]
    %v58 = vld [vmem:[#allocation3 + $0x24] sm:$0xf]
    %v59 = vld [vmem:[#allocation3 + $0x28] sm:$0xf]
    %v60 = vld [vmem:[#allocation3 + $0x2c] sm:$0xf]
    %v61 = vld [vmem:[#allocation3 + $0x30] sm:$0xf]
    %v62 = vld [vmem:[#allocation3 + $0x34] sm:$0xf]
    %v63 = vld [vmem:[#allocation3 + $0x38] sm:$0xf]
    %v64 = vld [vmem:[#allocation3 + $0x3c] sm:$0xf]
    %v65 = vld [vmem:[#allocation3 + $0x40] sm:$0xf]
    %v66 = vld [vmem:[#allocation3 + $0x44] sm:$0xf]
    %v67 = vld [vmem:[#allocation3 + $0x48] sm:$0xf]
    %v68 = vld [vmem:[#allocation3 + $0x4c] sm:$0xf]
    %v69 = vld [vmem:[#allocation3 + $0x50] sm:$0xf]
    %v70 = vld [vmem:[#allocation3 + $0x54] sm:$0xf]
    %v71 = vld [vmem:[#allocation3 + $0x58] sm:$0xf]
    %v72 = vld [vmem:[#allocation3 + $0x5c] sm:$0xf]
    %v73 = vld [vmem:[#allocation3 + $0x60] sm:$0xf]
    %v74 = vunpack.c.l.bf16 %v49
    %v75 = vunpack.c.l.bf16 %v50
    %v76 = vunpack.c.l.bf16 %v51
    %v77 = vunpack.c.l.bf16 %v52
    %v78 = vunpack.c.l.bf16 %v53
    %v79 = vunpack.c.l.bf16 %v54
    %v80 = vunpack.c.l.bf16 %v55
    %v81 = vunpack.c.l.bf16 %v56
    %v82 = vunpack.c.l.bf16 %v57
    %v83 = vunpack.c.l.bf16 %v58
    %v84 = vunpack.c.l.bf16 %v59
    %v85 = vunpack.c.l.bf16 %v60
    %v86 = vunpack.c.l.bf16 %v61
    %v87 = vunpack.c.l.bf16 %v62
    %v88 = vunpack.c.l.bf16 %v63
    %v89 = vunpack.c.l.bf16 %v64
    %v90 = vunpack.c.l.bf16 %v65
    %v91 = vunpack.c.l.bf16 %v66
    %v92 = vunpack.c.l.bf16 %v67
    %v93 = vunpack.c.l.bf16 %v68
    %v94 = vunpack.c.l.bf16 %v69
    %v95 = vunpack.c.l.bf16 %v70
    %v96 = vunpack.c.l.bf16 %v71
    %v97 = vunpack.c.l.bf16 %v72
    %v98 = vunpack.c.l.bf16 %v73
    %v100 = vlaneseq
    %v101 = vshrl.u32 %v100, 7
    %v102 = vsub.s32 0, %v101
    %v103 = vrot.slane %v48, %v102
    %v105 = vmul.f32 %v74, %v103
    %v106 = vmul.f32 %v75, %v103
    %v107 = vmul.f32 %v76, %v103
    %v108 = vmul.f32 %v77, %v103
    %v109 = vmul.f32 %v78, %v103
    %v110 = vmul.f32 %v79, %v103
    %v111 = vmul.f32 %v80, %v103
    %v112 = vmul.f32 %v81, %v103
    %v113 = vmul.f32 %v82, %v103
    %v114 = vmul.f32 %v83, %v103
    %v115 = vmul.f32 %v84, %v103
    %v116 = vmul.f32 %v85, %v103
    %v117 = vmul.f32 %v86, %v103
    %v118 = vmul.f32 %v87, %v103
    %v119 = vmul.f32 %v88, %v103
    %v120 = vmul.f32 %v89, %v103
    %v121 = vmul.f32 %v90, %v103
    %v122 = vmul.f32 %v91, %v103
    %v123 = vmul.f32 %v92, %v103
    %v124 = vmul.f32 %v93, %v103
    %v125 = vmul.f32 %v94, %v103
    %v126 = vmul.f32 %v95, %v103
    %v127 = vmul.f32 %v96, %v103
    %v128 = vmul.f32 %v97, %v103
    %v129 = vmul.f32 %v98, %v103
    %v130 = vpack.c.bf16 %v106, %v105
    %v131 = vpack.c.bf16 %v108, %v107
    %v132 = vpack.c.bf16 %v110, %v109
    %v133 = vpack.c.bf16 %v112, %v111
    %v134 = vpack.c.bf16 %v114, %v113
    %v135 = vpack.c.bf16 %v116, %v115
    %v136 = vpack.c.bf16 %v118, %v117
    %v137 = vpack.c.bf16 %v120, %v119
    %v138 = vpack.c.bf16 %v122, %v121
    %v139 = vpack.c.bf16 %v124, %v123
    %v140 = vpack.c.bf16 %v126, %v125
    %v141 = vpack.c.bf16 %v128, %v127
    %v142 = vpack.c.bf16 %v129, %v129
    %v143 = vld [vmem:[#allocation6] sm:$0xf]
    %v144 = vld [vmem:[#allocation6 + $0x4] sm:$0xf]
    %v145 = vld [vmem:[#allocation6 + $0x8] sm:$0xf]
    %v146 = vld [vmem:[#allocation6 + $0xc] sm:$0xf]
    %v147 = vld [vmem:[#allocation6 + $0x10] sm:$0xf]
    %v148 = vld [vmem:[#allocation6 + $0x14] sm:$0xf]
    %v149 = vld [vmem:[#allocation6 + $0x18] sm:$0xf]
    %v150 = vld [vmem:[#allocation6 + $0x1c] sm:$0xf]
    %v151 = vld [vmem:[#allocation6 + $0x20] sm:$0xf]
    %v152 = vld [vmem:[#allocation6 + $0x24] sm:$0xf]
    %v153 = vld [vmem:[#allocation6 + $0x28] sm:$0xf]
    %v154 = vld [vmem:[#allocation6 + $0x2c] sm:$0xf]
    %v155 = vld [vmem:[#allocation6 + $0x30] sm:$0xf]
    %v156 = vld [vmem:[#allocation6 + $0x34] sm:$0xf]
    %v157 = vld [vmem:[#allocation6 + $0x38] sm:$0xf]
    %v158 = vld [vmem:[#allocation6 + $0x3c] sm:$0xf]
    %v159 = vld [vmem:[#allocation6 + $0x40] sm:$0xf]
    %v160 = vld [vmem:[#allocation6 + $0x44] sm:$0xf]
    %v161 = vld [vmem:[#allocation6 + $0x48] sm:$0xf]
    %v162 = vld [vmem:[#allocation6 + $0x4c] sm:$0xf]
    %v163 = vld [vmem:[#allocation6 + $0x50] sm:$0xf]
    %v164 = vld [vmem:[#allocation6 + $0x54] sm:$0xf]
    %v165 = vld [vmem:[#allocation6 + $0x58] sm:$0xf]
    %v166 = vld [vmem:[#allocation6 + $0x5c] sm:$0xf]
    %v167 = vld [vmem:[#allocation6 + $0x60] sm:$0xf]
    %v168 = vld [vmem:[#allocation6 + $0x64] sm:$0xf]
    %v169 = vld [vmem:[#allocation6 + $0x68] sm:$0xf]
    %v170 = vld [vmem:[#allocation6 + $0x6c] sm:$0xf]
    %v171 = vld [vmem:[#allocation6 + $0x70] sm:$0xf]
    %v172 = vld [vmem:[#allocation6 + $0x74] sm:$0xf]
    %v173 = vld [vmem:[#allocation6 + $0x78] sm:$0xf]
    %v174 = vld [vmem:[#allocation6 + $0x7c] sm:$0xf]
    %v175 = vld [vmem:[#allocation6 + $0x80] sm:$0xf]
    %v176 = vld [vmem:[#allocation6 + $0x84] sm:$0xf]
    %v177 = vld [vmem:[#allocation6 + $0x88] sm:$0xf]
    %v178 = vld [vmem:[#allocation6 + $0x8c] sm:$0xf]
    %v179 = vld [vmem:[#allocation6 + $0x90] sm:$0xf]
    %v180 = vld [vmem:[#allocation6 + $0x94] sm:$0xf]
    %s181 = sld [smem:[#allocation2]]
    %v182 = vstv %s181
    %v221 = vunpack.c.l.b16 %v143
    %v222 = vunpack.c.l.b16 %v144
    %v223 = vunpack.c.l.b16 %v145
    %v224 = vunpack.c.l.b16 %v146
    %v225 = vunpack.c.l.b16 %v147
    %v226 = vunpack.c.l.b16 %v148
    %v227 = vunpack.c.l.b16 %v149
    %v228 = vunpack.c.l.b16 %v150
    %v229 = vunpack.c.l.b16 %v151
    %v230 = vunpack.c.l.b16 %v152
    %v231 = vunpack.c.l.b16 %v153
    %v232 = vunpack.c.l.b16 %v154
    %v233 = vunpack.c.l.b16 %v155
    %v234 = vunpack.c.l.b16 %v156
    %v235 = vunpack.c.l.b16 %v157
    %v236 = vunpack.c.l.b16 %v158
    %v237 = vunpack.c.l.b16 %v159
    %v238 = vunpack.c.l.b16 %v160
    %v239 = vunpack.c.l.b16 %v161
    %v240 = vunpack.c.l.b16 %v162
    %v241 = vunpack.c.l.b16 %v163
    %v242 = vunpack.c.l.b16 %v164
    %v243 = vunpack.c.l.b16 %v165
    %v244 = vunpack.c.l.b16 %v166
    %v245 = vunpack.c.l.b16 %v167
    %v246 = vunpack.c.l.b16 %v168
    %v247 = vunpack.c.l.b16 %v169
    %v248 = vunpack.c.l.b16 %v170
    %v249 = vunpack.c.l.b16 %v171
    %v250 = vunpack.c.l.b16 %v172
    %v251 = vunpack.c.l.b16 %v173
    %v252 = vunpack.c.l.b16 %v174
    %v253 = vunpack.c.l.b16 %v175
    %v254 = vunpack.c.l.b16 %v176
    %v255 = vunpack.c.l.b16 %v177
    %v256 = vunpack.c.l.b16 %v178
    %v257 = vunpack.c.l.b16 %v179
    %v258 = vunpack.c.l.b16 %v180
    %v259 = vpack.c.b16 %v222, %v221
    %v260 = vpack.c.b16 %v224, %v223
    %v261 = vpack.c.b16 %v226, %v225
    %v262 = vpack.c.b16 %v228, %v227
    %v263 = vpack.c.b16 %v230, %v229
    %v264 = vpack.c.b16 %v232, %v231
    %v265 = vpack.c.b16 %v234, %v233
    %v266 = vpack.c.b16 %v236, %v235
    %v267 = vpack.c.b16 %v238, %v237
    %v268 = vpack.c.b16 %v240, %v239
    %v269 = vpack.c.b16 %v242, %v241
    %v270 = vpack.c.b16 %v244, %v243
    %v271 = vpack.c.b16 %v246, %v245
    %v272 = vpack.c.b16 %v248, %v247
    %v273 = vpack.c.b16 %v250, %v249
    %v274 = vpack.c.b16 %v252, %v251
    %v275 = vpack.c.b16 %v254, %v253
    %v276 = vpack.c.b16 %v256, %v255
    %v277 = vpack.c.b16 %v258, %v257
    %297 = vmatprep.subr.bf16.mxu0 0
    %298 = vmatpush1.bf16.xpose.msra.mxu0 %v259
    %299 = vmatprep.subr.bf16.mxu0 0
    %300 = vmatpush1.bf16.xpose.msra.mxu0 %v260
    %301 = vmatprep.subr.bf16.mxu0 0
    %302 = vmatpush1.bf16.xpose.msra.mxu0 %v261
    %303 = vmatprep.subr.bf16.mxu0 0
    %304 = vmatpush1.bf16.xpose.msra.mxu0 %v262
    %305 = vmatprep.subr.bf16.mxu0 0
    %306 = vmatpush1.bf16.xpose.msra.mxu0 %v263
    %307 = vmatprep.subr.bf16.mxu0 0
    %308 = vmatpush1.bf16.xpose.msra.mxu0 %v264
    %309 = vmatprep.subr.bf16.mxu0 0
    %310 = vmatpush1.bf16.xpose.msra.mxu0 %v265
    %311 = vmatprep.subr.bf16.mxu0 0
    %312 = vmatpush1.bf16.xpose.msra.mxu0 %v266
    %313 = vmatprep.subr.bf16.mxu0 0
    %314 = vmatpush1.bf16.xpose.msra.mxu0 %v267
    %315 = vmatprep.subr.bf16.mxu0 0
    %316 = vmatpush1.bf16.xpose.msra.mxu0 %v268
    %317 = vmatprep.subr.bf16.mxu0 0
    %318 = vmatpush1.bf16.xpose.msra.mxu0 %v269
    %319 = vmatprep.subr.bf16.mxu0 0
    %320 = vmatpush1.bf16.xpose.msra.mxu0 %v270
    %321 = vmatprep.subr.bf16.mxu0 0
    %322 = vmatpush1.bf16.xpose.msra.mxu0 %v271
    %323 = vmatprep.subr.bf16.mxu0 0
    %324 = vmatpush1.bf16.xpose.msra.mxu0 %v272
    %325 = vmatprep.subr.bf16.mxu0 0
    %326 = vmatpush1.bf16.xpose.msra.mxu0 %v273
    %327 = vmatprep.subr.bf16.mxu0 0
    %328 = vmatpush1.bf16.xpose.msra.mxu0 %v274
    %329 = vmatprep.mubr.bf16.mxu0 0
    %330 = vmatmul.mubr.bf16.gmra.mrb[0].mxu0 %v130
    %v331 = vpop.f32.mrb[0].mxu0
    %v332 = vadd.f32 %v182, %v331
    %v333 = vpop.f32.mrb[0].mxu0
    %v334 = vadd.f32 %v182, %v333
    %v335 = vpop.f32.mrb[0].mxu0
    %v336 = vadd.f32 %v182, %v335
    %v337 = vpop.f32.mrb[0].mxu0
    %v338 = vadd.f32 %v182, %v337
    %339 = vmatprep.mubr.bf16.mxu0 0
    %340 = vmatmul.mubr.bf16.gmra.mrb[0].mxu0 %v131
    %v341 = vpop.f32.mrb[0].mxu0
    %v342 = vadd.f32 %v182, %v341
    %v343 = vpop.f32.mrb[0].mxu0
    %v344 = vadd.f32 %v182, %v343
    %v345 = vpop.f32.mrb[0].mxu0
    %v346 = vadd.f32 %v182, %v345
    %v347 = vpop.f32.mrb[0].mxu0
    %v348 = vadd.f32 %v182, %v347
    %349 = vmatprep.mubr.bf16.mxu0 0
    %350 = vmatmul.mubr.bf16.gmra.mrb[0].mxu0 %v132
    %v351 = vpop.f32.mrb[0].mxu0
    %v352 = vadd.f32 %v182, %v351
    %v353 = vpop.f32.mrb[0].mxu0
    %v354 = vadd.f32 %v182, %v353
    %v355 = vpop.f32.mrb[0].mxu0
    %v356 = vadd.f32 %v182, %v355
    %v357 = vpop.f32.mrb[0].mxu0
    %v358 = vadd.f32 %v182, %v357
    %359 = vmatprep.mubr.bf16.mxu0 0
    %360 = vmatmul.mubr.bf16.gmra.mrb[0].mxu0 %v133
    %v361 = vpop.f32.mrb[0].mxu0
    %v362 = vadd.f32 %v182, %v361
    %v363 = vpop.f32.mrb[0].mxu0
    %v364 = vadd.f32 %v182, %v363
    %v365 = vpop.f32.mrb[0].mxu0
    %v366 = vadd.f32 %v182, %v365
    %v367 = vpop.f32.mrb[0].mxu0
    %v368 = vadd.f32 %v182, %v367
    %369 = vmatprep.mubr.bf16.mxu0 0
    %370 = vmatmul.mubr.bf16.gmra.mrb[0].mxu0 %v134
    %v371 = vpop.f32.mrb[0].mxu0
    %v372 = vadd.f32 %v182, %v371
    %v373 = vpop.f32.mrb[0].mxu0
    %v374 = vadd.f32 %v182, %v373
    %v375 = vpop.f32.mrb[0].mxu0
    %v376 = vadd.f32 %v182, %v375
    %v377 = vpop.f32.mrb[0].mxu0
    %v378 = vadd.f32 %v182, %v377
    %379 = vmatprep.mubr.bf16.mxu0 0
    %380 = vmatmul.mubr.bf16.gmra.mrb[0].mxu0 %v135
    %v381 = vpop.f32.mrb[0].mxu0
    %v382 = vadd.f32 %v182, %v381
    %v383 = vpop.f32.mrb[0].mxu0
    %v384 = vadd.f32 %v182, %v383
    %v385 = vpop.f32.mrb[0].mxu0
    %v386 = vadd.f32 %v182, %v385
    %v387 = vpop.f32.mrb[0].mxu0
    %v388 = vadd.f32 %v182, %v387
    %389 = vmatprep.mubr.bf16.mxu0 0
    %390 = vmatmul.mubr.bf16.gmra.mrb[0].mxu0 %v136
    %v391 = vpop.f32.mrb[0].mxu0
    %v392 = vadd.f32 %v182, %v391
    %v393 = vpop.f32.mrb[0].mxu0
    %v394 = vadd.f32 %v182, %v393
    %v395 = vpop.f32.mrb[0].mxu0
    %v396 = vadd.f32 %v182, %v395
    %v397 = vpop.f32.mrb[0].mxu0
    %v398 = vadd.f32 %v182, %v397
    %399 = vmatprep.mubr.bf16.mxu0 0
    %400 = vmatmul.mubr.bf16.gmra.mrb[0].mxu0 %v137
    %v401 = vpop.f32.mrb[0].mxu0
    %v402 = vadd.f32 %v182, %v401
    %v403 = vpop.f32.mrb[0].mxu0
    %v404 = vadd.f32 %v182, %v403
    %v405 = vpop.f32.mrb[0].mxu0
    %v406 = vadd.f32 %v182, %v405
    %v407 = vpop.f32.mrb[0].mxu0
    %v408 = vadd.f32 %v182, %v407
    %409 = vmatprep.mubr.bf16.mxu0 0
    %410 = vmatmul.mubr.bf16.gmra.mrb[0].mxu0 %v138
    %v411 = vpop.f32.mrb[0].mxu0
    %v412 = vadd.f32 %v182, %v411
    %v413 = vpop.f32.mrb[0].mxu0
    %v414 = vadd.f32 %v182, %v413
    %v415 = vpop.f32.mrb[0].mxu0
    %v416 = vadd.f32 %v182, %v415
    %v417 = vpop.f32.mrb[0].mxu0
    %v418 = vadd.f32 %v182, %v417
    %419 = vmatprep.mubr.bf16.mxu0 0
    %420 = vmatmul.mubr.bf16.gmra.mrb[0].mxu0 %v139
    %v421 = vpop.f32.mrb[0].mxu0
    %v422 = vadd.f32 %v182, %v421
    %v423 = vpop.f32.mrb[0].mxu0
    %v424 = vadd.f32 %v182, %v423
    %v425 = vpop.f32.mrb[0].mxu0
    %v426 = vadd.f32 %v182, %v425
    %v427 = vpop.f32.mrb[0].mxu0
    %v428 = vadd.f32 %v182, %v427
    %429 = vmatprep.mubr.bf16.mxu0 0
    %430 = vmatmul.mubr.bf16.gmra.mrb[0].mxu0 %v140
    %v431 = vpop.f32.mrb[0].mxu0
    %v432 = vadd.f32 %v182, %v431
    %v433 = vpop.f32.mrb[0].mxu0
    %v434 = vadd.f32 %v182, %v433
    %v435 = vpop.f32.mrb[0].mxu0
    %v436 = vadd.f32 %v182, %v435
    %v437 = vpop.f32.mrb[0].mxu0
    %v438 = vadd.f32 %v182, %v437
    %439 = vmatprep.mubr.bf16.mxu0 0
    %440 = vmatmul.mubr.bf16.gmra.mrb[0].mxu0 %v141
    %v441 = vpop.f32.mrb[0].mxu0
    %v442 = vadd.f32 %v182, %v441
    %v443 = vpop.f32.mrb[0].mxu0
    %v444 = vadd.f32 %v182, %v443
    %v445 = vpop.f32.mrb[0].mxu0
    %v446 = vadd.f32 %v182, %v445
    %v447 = vpop.f32.mrb[0].mxu0
    %v448 = vadd.f32 %v182, %v447
    %449 = vmatprep.mubr.bf16.mxu0 0
    %450 = vmatmul.mubr.bf16.gmra.mrb[0].mxu0 %v142
    %v451 = vpop.f32.mrb[0].mxu0
    %v452 = vadd.f32 %v182, %v451
    %v453 = vpop.f32.mrb[0].mxu0
    %v454 = vadd.f32 %v182, %v453
    %v455 = vpop.f32.mrb[0].mxu0
    %v456 = vpop.f32.mrb[0].mxu0
    %457 = vdwg.mxu0
    %458 = vmatprep.subr.bf16.mxu0 0
    %459 = vmatpush1.bf16.xpose.msra.mxu0 %v275
    %460 = vmatprep.subr.bf16.mxu0 0
    %461 = vmatpush1.bf16.xpose.msra.mxu0 %v276
    %462 = vmatprep.subr.bf16.mxu0 0
    %463 = vmatpush1.bf16.xpose.msra.mxu0 %v277
    %464 = vmatprep.subr.bf16.mxu0 0
    %465 = vmatpush1.bf16.xpose.msra.mxu0 0
    %466 = vmatprep.subr.bf16.mxu0 0
    %467 = vmatpush1.bf16.xpose.msra.mxu0 0
    %468 = vmatprep.subr.bf16.mxu0 0
    %469 = vmatpush1.bf16.xpose.msra.mxu0 0
    %470 = vmatprep.subr.bf16.mxu0 0
    %471 = vmatpush1.bf16.xpose.msra.mxu0 0
    %472 = vmatprep.subr.bf16.mxu0 0
    %473 = vmatpush1.bf16.xpose.msra.mxu0 0
    %474 = vmatprep.subr.bf16.mxu0 0
    %475 = vmatpush1.bf16.xpose.msra.mxu0 0
    %476 = vmatprep.subr.bf16.mxu0 0
    %477 = vmatpush1.bf16.xpose.msra.mxu0 0
    %478 = vmatprep.subr.bf16.mxu0 0
    %479 = vmatpush1.bf16.xpose.msra.mxu0 0
    %480 = vmatprep.subr.bf16.mxu0 0
    %481 = vmatpush1.bf16.xpose.msra.mxu0 0
    %482 = vmatprep.subr.bf16.mxu0 0
    %483 = vmatpush1.bf16.xpose.msra.mxu0 0
    %484 = vmatprep.subr.bf16.mxu0 0
    %485 = vmatpush1.bf16.xpose.msra.mxu0 0
    %486 = vmatprep.subr.bf16.mxu0 0
    %487 = vmatpush1.bf16.xpose.msra.mxu0 0
    %488 = vmatprep.subr.bf16.mxu0 0
    %489 = vmatpush1.bf16.xpose.msra.mxu0 0
    %490 = vmatprep.mubr.bf16.mxu0 0
    %491 = vmatmul.mubr.bf16.gmra.mrb[0].mxu0 %v130
    %v492 = vpop.f32.mrb[0].mxu0
    %v493 = vadd.f32 %v182, %v492
    %v494 = vpop.f32.mrb[0].mxu0
    %v495 = vpop.f32.mrb[0].mxu0
    %v496 = vadd.f32 %v182, %v495
    %v497 = vpop.f32.mrb[0].mxu0
    %498 = vmatprep.mubr.bf16.mxu0 0
    %499 = vmatmul.mubr.bf16.gmra.mrb[0].mxu0 %v131
    %v500 = vpop.f32.mrb[0].mxu0
    %v501 = vadd.f32 %v182, %v500
    %v502 = vpop.f32.mrb[0].mxu0
    %v503 = vpop.f32.mrb[0].mxu0
    %v504 = vadd.f32 %v182, %v503
    %v505 = vpop.f32.mrb[0].mxu0
    %506 = vmatprep.mubr.bf16.mxu0 0
    %507 = vmatmul.mubr.bf16.gmra.mrb[0].mxu0 %v132
    %v508 = vpop.f32.mrb[0].mxu0
    %v509 = vadd.f32 %v182, %v508
    %v510 = vpop.f32.mrb[0].mxu0
    %v511 = vpop.f32.mrb[0].mxu0
    %v512 = vadd.f32 %v182, %v511
    %v513 = vpop.f32.mrb[0].mxu0
    %514 = vmatprep.mubr.bf16.mxu0 0
    %515 = vmatmul.mubr.bf16.gmra.mrb[0].mxu0 %v133
    %v516 = vpop.f32.mrb[0].mxu0
    %v517 = vadd.f32 %v182, %v516
    %v518 = vpop.f32.mrb[0].mxu0
    %v519 = vpop.f32.mrb[0].mxu0
    %v520 = vadd.f32 %v182, %v519
    %v521 = vpop.f32.mrb[0].mxu0
    %522 = vmatprep.mubr.bf16.mxu0 0
    %523 = vmatmul.mubr.bf16.gmra.mrb[0].mxu0 %v134
    %v524 = vpop.f32.mrb[0].mxu0
    %v525 = vadd.f32 %v182, %v524
    %v526 = vpop.f32.mrb[0].mxu0
    %v527 = vpop.f32.mrb[0].mxu0
    %v528 = vadd.f32 %v182, %v527
    %v529 = vpop.f32.mrb[0].mxu0
    %530 = vmatprep.mubr.bf16.mxu0 0
    %531 = vmatmul.mubr.bf16.gmra.mrb[0].mxu0 %v135
    %v532 = vpop.f32.mrb[0].mxu0
    %v533 = vadd.f32 %v182, %v532
    %v534 = vpop.f32.mrb[0].mxu0
    %v535 = vpop.f32.mrb[0].mxu0
    %v536 = vadd.f32 %v182, %v535
    %v537 = vpop.f32.mrb[0].mxu0
    %538 = vmatprep.mubr.bf16.mxu0 0
    %539 = vmatmul.mubr.bf16.gmra.mrb[0].mxu0 %v136
    %v540 = vpop.f32.mrb[0].mxu0
    %v541 = vadd.f32 %v182, %v540
    %v542 = vpop.f32.mrb[0].mxu0
    %v543 = vpop.f32.mrb[0].mxu0
    %v544 = vadd.f32 %v182, %v543
    %v545 = vpop.f32.mrb[0].mxu0
    %546 = vmatprep.mubr.bf16.mxu0 0
    %547 = vmatmul.mubr.bf16.gmra.mrb[0].mxu0 %v137
    %v548 = vpop.f32.mrb[0].mxu0
    %v549 = vadd.f32 %v182, %v548
    %v550 = vpop.f32.mrb[0].mxu0
    %v551 = vpop.f32.mrb[0].mxu0
    %v552 = vadd.f32 %v182, %v551
    %v553 = vpop.f32.mrb[0].mxu0
    %554 = vmatprep.mubr.bf16.mxu0 0
    %555 = vmatmul.mubr.bf16.gmra.mrb[0].mxu0 %v138
    %v556 = vpop.f32.mrb[0].mxu0
    %v557 = vadd.f32 %v182, %v556
    %v558 = vpop.f32.mrb[0].mxu0
    %v559 = vpop.f32.mrb[0].mxu0
    %v560 = vadd.f32 %v182, %v559
    %v561 = vpop.f32.mrb[0].mxu0
    %562 = vmatprep.mubr.bf16.mxu0 0
    %563 = vmatmul.mubr.bf16.gmra.mrb[0].mxu0 %v139
    %v564 = vpop.f32.mrb[0].mxu0
    %v565 = vadd.f32 %v182, %v564
    %v566 = vpop.f32.mrb[0].mxu0
    %v567 = vpop.f32.mrb[0].mxu0
    %v568 = vadd.f32 %v182, %v567
    %v569 = vpop.f32.mrb[0].mxu0
    %570 = vmatprep.mubr.bf16.mxu0 0
    %571 = vmatmul.mubr.bf16.gmra.mrb[0].mxu0 %v140
    %v572 = vpop.f32.mrb[0].mxu0
    %v573 = vadd.f32 %v182, %v572
    %v574 = vpop.f32.mrb[0].mxu0
    %v575 = vpop.f32.mrb[0].mxu0
    %v576 = vadd.f32 %v182, %v575
    %v577 = vpop.f32.mrb[0].mxu0
    %578 = vmatprep.mubr.bf16.mxu0 0
    %579 = vmatmul.mubr.bf16.gmra.mrb[0].mxu0 %v141
    %v580 = vpop.f32.mrb[0].mxu0
    %v581 = vadd.f32 %v182, %v580
    %v582 = vpop.f32.mrb[0].mxu0
    %v583 = vpop.f32.mrb[0].mxu0
    %v584 = vadd.f32 %v182, %v583
    %v585 = vpop.f32.mrb[0].mxu0
    %586 = vmatprep.mubr.bf16.mxu0 0
    %587 = vmatmul.mubr.bf16.gmra.mrb[0].mxu0 %v142
    %v588 = vpop.f32.mrb[0].mxu0
    %v589 = vadd.f32 %v182, %v588
    %v590 = vpop.f32.mrb[0].mxu0
    %v591 = vpop.f32.mrb[0].mxu0
    %v592 = vpop.f32.mrb[0].mxu0
    %593 = vdwg.mxu0
    %594 = vst [vmem:[#allocation8] sm:$0xff] %v332
    %595 = vst [vmem:[#allocation8 + $0x8] sm:$0xff] %v334
    %vm596 = vcmask 392192
    %597 = vst.msk [vmem:[#allocation8 + $0x10] sm:$0xff] %vm596, %v493
    %598 = vst [vmem:[#allocation8 + $0x18] sm:$0xff] %v336
    %599 = vst [vmem:[#allocation8 + $0x20] sm:$0xff] %v338
    %600 = vst.msk [vmem:[#allocation8 + $0x28] sm:$0xff] %vm596, %v496
    %601 = vst [vmem:[#allocation8 + $0x30] sm:$0xff] %v342
    %602 = vst [vmem:[#allocation8 + $0x38] sm:$0xff] %v344
    %603 = vst.msk [vmem:[#allocation8 + $0x40] sm:$0xff] %vm596, %v501
    %604 = vst [vmem:[#allocation8 + $0x48] sm:$0xff] %v346
    %605 = vst [vmem:[#allocation8 + $0x50] sm:$0xff] %v348
    %606 = vst.msk [vmem:[#allocation8 + $0x58] sm:$0xff] %vm596, %v504
    %607 = vst [vmem:[#allocation8 + $0x60] sm:$0xff] %v352
    %608 = vst [vmem:[#allocation8 + $0x68] sm:$0xff] %v354
    %609 = vst.msk [vmem:[#allocation8 + $0x70] sm:$0xff] %vm596, %v509
    %610 = vst [vmem:[#allocation8 + $0x78] sm:$0xff] %v356
    %611 = vst [vmem:[#allocation8 + $0x80] sm:$0xff] %v358
    %612 = vst.msk [vmem:[#allocation8 + $0x88] sm:$0xff] %vm596, %v512
    %613 = vst [vmem:[#allocation8 + $0x90] sm:$0xff] %v362
    %614 = vst [vmem:[#allocation8 + $0x98] sm:$0xff] %v364
    %615 = vst.msk [vmem:[#allocation8 + $0xa0] sm:$0xff] %vm596, %v517
    %616 = vst [vmem:[#allocation8 + $0xa8] sm:$0xff] %v366
    %617 = vst [vmem:[#allocation8 + $0xb0] sm:$0xff] %v368
    %618 = vst.msk [vmem:[#allocation8 + $0xb8] sm:$0xff] %vm596, %v520
    %619 = vst [vmem:[#allocation8 + $0xc0] sm:$0xff] %v372
    %620 = vst [vmem:[#allocation8 + $0xc8] sm:$0xff] %v374
    %621 = vst.msk [vmem:[#allocation8 + $0xd0] sm:$0xff] %vm596, %v525
    %622 = vst [vmem:[#allocation8 + $0xd8] sm:$0xff] %v376
    %623 = vst [vmem:[#allocation8 + $0xe0] sm:$0xff] %v378
    %624 = vst.msk [vmem:[#allocation8 + $0xe8] sm:$0xff] %vm596, %v528
    %625 = vst [vmem:[#allocation8 + $0xf0] sm:$0xff] %v382
    %626 = vst [vmem:[#allocation8 + $0xf8] sm:$0xff] %v384
    %627 = vst.msk [vmem:[#allocation8 + $0x100] sm:$0xff] %vm596, %v533
    %628 = vst [vmem:[#allocation8 + $0x108] sm:$0xff] %v386
    %629 = vst [vmem:[#allocation8 + $0x110] sm:$0xff] %v388
    %630 = vst.msk [vmem:[#allocation8 + $0x118] sm:$0xff] %vm596, %v536
    %631 = vst [vmem:[#allocation8 + $0x120] sm:$0xff] %v392
    %632 = vst [vmem:[#allocation8 + $0x128] sm:$0xff] %v394
    %633 = vst.msk [vmem:[#allocation8 + $0x130] sm:$0xff] %vm596, %v541
    %634 = vst [vmem:[#allocation8 + $0x138] sm:$0xff] %v396
    %635 = vst [vmem:[#allocation8 + $0x140] sm:$0xff] %v398
    %636 = vst.msk [vmem:[#allocation8 + $0x148] sm:$0xff] %vm596, %v544
    %637 = vst [vmem:[#allocation8 + $0x150] sm:$0xff] %v402
    %638 = vst [vmem:[#allocation8 + $0x158] sm:$0xff] %v404
    %639 = vst.msk [vmem:[#allocation8 + $0x160] sm:$0xff] %vm596, %v549
    %640 = vst [vmem:[#allocation8 + $0x168] sm:$0xff] %v406
    %641 = vst [vmem:[#allocation8 + $0x170] sm:$0xff] %v408
    %642 = vst.msk [vmem:[#allocation8 + $0x178] sm:$0xff] %vm596, %v552
    %643 = vst [vmem:[#allocation8 + $0x180] sm:$0xff] %v412
    %644 = vst [vmem:[#allocation8 + $0x188] sm:$0xff] %v414
    %645 = vst.msk [vmem:[#allocation8 + $0x190] sm:$0xff] %vm596, %v557
    %646 = vst [vmem:[#allocation8 + $0x198] sm:$0xff] %v416
    %647 = vst [vmem:[#allocation8 + $0x1a0] sm:$0xff] %v418
    %648 = vst.msk [vmem:[#allocation8 + $0x1a8] sm:$0xff] %vm596, %v560
    %649 = vst [vmem:[#allocation8 + $0x1b0] sm:$0xff] %v422
    %650 = vst [vmem:[#allocation8 + $0x1b8] sm:$0xff] %v424
    %651 = vst.msk [vmem:[#allocation8 + $0x1c0] sm:$0xff] %vm596, %v565
    %652 = vst [vmem:[#allocation8 + $0x1c8] sm:$0xff] %v426
    %653 = vst [vmem:[#allocation8 + $0x1d0] sm:$0xff] %v428
    %654 = vst.msk [vmem:[#allocation8 + $0x1d8] sm:$0xff] %vm596, %v568
    %655 = vst [vmem:[#allocation8 + $0x1e0] sm:$0xff] %v432
    %656 = vst [vmem:[#allocation8 + $0x1e8] sm:$0xff] %v434
    %657 = vst.msk [vmem:[#allocation8 + $0x1f0] sm:$0xff] %vm596, %v573
    %658 = vst [vmem:[#allocation8 + $0x1f8] sm:$0xff] %v436
    %659 = vst [vmem:[#allocation8 + $0x200] sm:$0xff] %v438
    %660 = vst.msk [vmem:[#allocation8 + $0x208] sm:$0xff] %vm596, %v576
    %661 = vst [vmem:[#allocation8 + $0x210] sm:$0xff] %v442
    %662 = vst [vmem:[#allocation8 + $0x218] sm:$0xff] %v444
    %663 = vst.msk [vmem:[#allocation8 + $0x220] sm:$0xff] %vm596, %v581
    %664 = vst [vmem:[#allocation8 + $0x228] sm:$0xff] %v446
    %665 = vst [vmem:[#allocation8 + $0x230] sm:$0xff] %v448
    %666 = vst.msk [vmem:[#allocation8 + $0x238] sm:$0xff] %vm596, %v584
    %667 = vst [vmem:[#allocation8 + $0x240] sm:$0xff] %v452
    %668 = vst [vmem:[#allocation8 + $0x248] sm:$0xff] %v454
    %669 = vst.msk [vmem:[#allocation8 + $0x250] sm:$0xff] %vm596, %v589
    // Predicated region
    $region26: #{tpu_custom_call.1} parent=1 // pred_check
      _
    $region27: #{tpu_custom_call.1} parent=1 // pred_check_branch
      %671 = sbr.rel (0) target = $region29
    $region28: #{tpu_custom_call.1} parent=1 // pred_region
      %s673 = ssub.s32 9600, 9600
      %674 = vsyncadd [#allocation5], %s673
      %s675 = sshll.u32 [#allocation8], 4
      %s676 = int_to_ptr.vmem [resolvable:$true] %s675
      %681 = dma.vmem_to_hbm [thread:$0]  %s676, 9600, %s4, [#allocation5], 384, 384, 24
    $region29: #{tpu_custom_call.1} parent=1 // pred_fallthru
      _
    // Predicated region
    $region30: #{tpu_custom_call.1} parent=1 // pred_check
      _
    $region31: #{tpu_custom_call.1} parent=1 // pred_check_branch
      %683 = sbr.rel (0) target = $region33
    $region32: #{tpu_custom_call.1} parent=1 // pred_region
      %684 = dma.done [#allocation5], 9600
    $region33: #{tpu_custom_call.1} parent=1 // pred_fallthru
      _
    %685 = vsyncpa [#allocation4], 1
    %686 = vsyncpa [#allocation7], 1
    %687 = vsyncpa [#allocation5], 1

</llo_original>
